<compile_context>
chip_gen: v6e
topology: v6e:2x2x1
jax: 0.10.0
libtpu: 0.0.40
codegen_flags: <defaults>
</compile_context>

<pallas_src>
import functools
import math

import jax
import jax.numpy as jnp
from jax.experimental import pallas as pl
from jax.experimental.pallas import tpu as pltpu

LN_EPS = 1e-5  # nn.LayerNorm default


def step_nlp_kernel(layer_shapes, x_ref, w_ref, vec_ref, out_ref):
    """Fused StepNLP forward, channels-on-sublanes / batch-on-lanes.

    x_ref   : (c_in, block_b)  f32, lane-dense batch tile
    w_ref   : (max_out, sum(in_i)) packed weights, PyTorch (out, in) layout,
              layer i lives in columns [off_i, off_i + in_i)
    vec_ref : (max_ch, n_vec) f32 packed per-channel vectors, column order
              [b_0, g_0, beta_0, b_1, g_1, beta_1, ..., b_last, step_bias]
    out_ref : (c_out, block_b)
    """
    num_layers = len(layer_shapes)
    n_vec = vec_ref.shape[1]
    c_out = out_ref.shape[0]
    mxu_dtype = w_ref.dtype            # f32 (default) or bf16 (optional MXU feed)

    x = x_ref[...]                     # (c_in, block_b), always f32

    # Heaviside step term, from the ORIGINAL f32 x (not the MXU-dtype copy),
    # hoisted before the layer chain: frees x's vregs early and lets the VPU
    # compare overlap the first matmul's MXU latency.
    # torch.heaviside(x, x): 0 for x<0, x(==0) for x==0, 1 for x>0  ==  (x > 0).
    step_bias = vec_ref[0:c_out, n_vec - 1:n_vec]        # (c_out, 1)
    step_term = jnp.where(x > 0, step_bias, 0.0)         # (c_out, block_b), f32

    h = x.astype(mxu_dtype)            # no-op in the f32 default path
    col = 0
    w_off = 0
    for i, (out_i, in_i) in enumerate(layer_shapes):
        w = w_ref[0:out_i, w_off:w_off + in_i]           # static slice, (out_i, in_i)
        w_off += in_i
        b = vec_ref[0:out_i, col:col + 1]                # (out_i, 1), f32
        col += 1
        # MXU matmul with N = block_b lanes fully populated; f32 accumulate.
        h = jnp.dot(w, h, preferred_element_type=jnp.float32) + b
        if i < num_layers - 1:
            # [Linear, ReLU, LayerNorm] for hidden layers.
            h = jnp.maximum(h, 0.0)                      # ReLU (VPU)
            gamma = vec_ref[0:out_i, col:col + 1]
            beta = vec_ref[0:out_i, col + 1:col + 2]
            col += 2
            # LayerNorm over the channel (sublane) axis, per batch column (f32).
            mean = jnp.mean(h, axis=0, keepdims=True)
            diff = h - mean
            var = jnp.mean(diff * diff, axis=0, keepdims=True)
            h = diff * jax.lax.rsqrt(var + LN_EPS) * gamma + beta
            h = h.astype(mxu_dtype)    # no-op unless bf16 MXU feed is requested
        else:
            # [Linear, Sigmoid] for the last layer: EUP exp + EUP approx recip.
            h = pl.reciprocal(1.0 + jnp.exp(-h), approx=True)

    out_ref[...] = (h + step_term).astype(out_ref.dtype)


@functools.partial(jax.jit,
                   static_argnames=("layer_shapes", "block_b", "compute_dtype"))
def step_nlp_forward(x, w_packed, vecs, layer_shapes, block_b=None,
                     compute_dtype=jnp.float32):
    """x: (B, c_in) f32.  w_packed: (max_out, sum(in_i)).  vecs: (max_ch, n_vec) f32.

    Entire relayout (transpose / cast) is inside this jit so XLA fuses it with
    adjacent ops; at large B prefer feeding/consuming (channels, batch) directly.
    """
    B, c_in = x.shape
    c_out = layer_shapes[-1][0]
    # StepNLP's `val + heaviside(x, x) * bias` requires in_channels == out_channels.
    assert c_in == c_out, "StepNLP step term requires in_channels == out_channels"

    if block_b is None:
        # Largest lane-dense tile that still yields ~2 grid steps (one per v7x
        # TensorCore); single-TC chips (v5e/v6e) just get 1-2 big serial steps.
        half = (B + 1) // 2
        block_b = ((half + 127) // 128) * 128
        block_b = max(128, min(4096, block_b))
    assert block_b % 128 == 0, "block_b must be a multiple of 128 (lane width)"

    num_blocks = pl.cdiv(B, block_b)   # partial last block handled by Pallas

    # Lane-dense orientation: batch on the last (lane) axis.  x stays f32 even
    # on the bf16 MXU-feed path (heaviside mask must see the f32 values).
    x_t = x.T.astype(jnp.float32)                 # (c_in, B)
    wp = w_packed.astype(compute_dtype)

    out_t = pl.pallas_call(
        functools.partial(step_nlp_kernel, layer_shapes),
        grid=(num_blocks,),
        in_specs=[
            pl.BlockSpec((c_in, block_b), lambda i: (0, i)),
            pl.BlockSpec(wp.shape, lambda i: (0, 0)),
            pl.BlockSpec(vecs.shape, lambda i: (0, 0)),
        ],
        out_specs=pl.BlockSpec((c_out, block_b), lambda i: (0, i)),
        out_shape=jax.ShapeDtypeStruct((c_out, B), jnp.float32),
        compiler_params=pltpu.CompilerParams(dimension_semantics=("parallel",)),
    )(x_t, wp, vecs)

    return out_t.T                                # back to (B, c_out)


def make_params(key, in_channels, out_channels, hidden_layers, hidden_neurons):
    """Init matching the module: Linear ~ U(-1/sqrt(fan_in), 1/sqrt(fan_in)) in
    PyTorch (out, in) layout, LayerNorm gamma=1 / beta=0, StepNLP.bias = zeros.

    Returns (weights_list, w_packed, vecs, layer_shapes) where
      w_packed packs all weight matrices column-wise: (max_out, sum(in_i)),
      vecs packs all per-channel vectors column-wise:
        [b_0, gamma_0, beta_0, ..., b_last, step_bias], shape (max_ch, n_vec).
    """
    weights = []
    cols = []
    layer_shapes = []
    for i in range(hidden_layers):
        in_i = in_channels if i == 0 else hidden_neurons
        out_i = out_channels if i == hidden_layers - 1 else hidden_neurons
        layer_shapes.append((out_i, in_i))
        key, kw, kb = jax.random.split(key, 3)
        bound = 1.0 / math.sqrt(in_i)
        weights.append(
            jax.random.uniform(kw, (out_i, in_i), jnp.float32, -bound, bound))
        cols.append(jax.random.uniform(kb, (out_i,), jnp.float32, -bound, bound))
        if i < hidden_layers - 1:
            cols.append(jnp.ones((out_i,), jnp.float32))    # LN gamma
            cols.append(jnp.zeros((out_i,), jnp.float32))   # LN beta
    cols.append(jnp.zeros((out_channels,), jnp.float32))    # StepNLP.bias (zeros)

    max_out = max(o for o, _ in layer_shapes)
    w_packed = jnp.concatenate(
        [jnp.pad(w, ((0, max_out - w.shape[0]), (0, 0))) for w in weights], axis=1)

    max_ch = max(int(c.shape[0]) for c in cols)
    vecs = jnp.stack(
        [jnp.pad(c, (0, max_ch - c.shape[0])) for c in cols], axis=1)
    return weights, w_packed, vecs, tuple(layer_shapes)


def reference_forward(x, weights, vecs, num_layers):
    """Pure-JAX f32 reference mirroring the PyTorch module exactly."""
    h = x.astype(jnp.float32)
    col = 0
    for i in range(num_layers):
        w = weights[i]
        out_i = w.shape[0]
        b = vecs[:out_i, col]
        col += 1
        h = h @ w.T + b
        if i < num_layers - 1:
            h = jnp.maximum(h, 0.0)
            gamma = vecs[:out_i, col]
            beta = vecs[:out_i, col + 1]
            col += 2
            mean = jnp.mean(h, axis=-1, keepdims=True)
            var = jnp.mean((h - mean) ** 2, axis=-1, keepdims=True)
            h = (h - mean) / jnp.sqrt(var + LN_EPS) * gamma + beta
        else:
            h = jax.nn.sigmoid(h)
    step_bias = vecs[:x.shape[1], col]
    step = jnp.where(x > 0, 1.0, 0.0)
    return h + step * step_bias


if __name__ == "__main__":
    # StepNLP's forward requires in_channels == out_channels.
    in_channels = 8
    out_channels = 8
    hidden_layers = 3
    hidden_neurons = 32
    batch = 300   # not a multiple of 128 -> exercises the partial last block;
                  # auto block_b = 256 -> grid = 2 (one block per v7x core).

    key = jax.random.PRNGKey(0)
    kx, kp = jax.random.split(key)
    x = jax.random.normal(kx, (batch, in_channels), jnp.float32)
    weights, w_packed, vecs, layer_shapes = make_params(
        kp, in_channels, out_channels, hidden_layers, hidden_neurons)

    # StepNLP.bias is zero-initialized; give it a non-zero value here so the
    # heaviside step path is actually exercised by the check.
    kb = jax.random.fold_in(kp, 123)
    vecs = vecs.at[:out_channels, -1].set(
        0.1 * jax.random.normal(kb, (out_channels,), jnp.float32))

    ref = reference_forward(x, weights, vecs, hidden_layers)

    # f32 path (default): exact module semantics; tolerance only covers the EUP
    # approximate reciprocal used inside the fused sigmoid.
    out_f32 = jax.block_until_ready(
        step_nlp_forward(x, w_packed, vecs, layer_shapes=layer_shapes))
    assert out_f32.shape == (batch, out_channels)
    assert jnp.allclose(out_f32, ref, atol=5e-3, rtol=5e-3), "f32 mismatch vs reference"

    # Optional bf16 MXU-feed path: bf16 weights/activations into the MXU with
    # f32 accumulate; x stays f32 so the heaviside mask matches the reference.
    out_bf16 = jax.block_until_ready(
        step_nlp_forward(x, w_packed, vecs, layer_shapes=layer_shapes,
                         compute_dtype=jnp.bfloat16))
    assert out_bf16.shape == (batch, out_channels)
    assert jnp.allclose(out_bf16, ref, atol=5e-2, rtol=5e-2), "bf16 mismatch vs reference"

    print("KERNEL_OK")
</pallas_src>

<mosaic_0001>
module attributes {stable_mosaic.version = 11 : i64} {
  func.func @step_nlp_kernel(%arg0: i32, %arg1: memref<8x256xf32, #tpu.memory_space<vmem>>, %arg2: memref<32x72xf32, #tpu.memory_space<vmem>>, %arg3: memref<32x8xf32, #tpu.memory_space<vmem>>, %arg4: memref<8x256xf32, #tpu.memory_space<vmem>>) attributes {dimension_semantics = [#tpu.dimension_semantics<parallel>], iteration_bounds = array<i64: 2>, scalar_prefetch = 0 : i64, scratch_operands = 0 : i64, tpu.core_type = #tpu.core_type<tc>, window_params = [{transform_indices = @transform_0, window_bounds = array<i64: 8, 256>}, {pipeline_mode = #tpu.pipeline_mode<synchronous>, transform_indices = @transform_1, window_bounds = array<i64: 32, 72>}, {pipeline_mode = #tpu.pipeline_mode<synchronous>, transform_indices = @transform_2, window_bounds = array<i64: 32, 8>}, {transform_indices = @transform_3, window_bounds = array<i64: 8, 256>}]} {
    %c0 = arith.constant 0 : index
    %c0_0 = arith.constant 0 : index
    %0 = vector.load %arg1[%c0, %c0_0] : memref<8x256xf32, #tpu.memory_space<vmem>>, vector<8x256xf32>
    %c0_1 = arith.constant 0 : index
    %c7 = arith.constant 7 : index
    %1 = vector.load %arg3[%c0_1, %c7] : memref<32x8xf32, #tpu.memory_space<vmem>>, vector<8x1xf32>
    %cst = arith.constant 0.000000e+00 : f32
    %2 = vector.broadcast %cst : f32 to vector<8x256xf32>
    %3 = arith.cmpf ogt, %0, %2 : vector<8x256xf32>
    %cst_2 = arith.constant 0.000000e+00 : f32
    %4 = vector.shape_cast %1 : vector<8x1xf32> to vector<8x1xf32>
    %5 = vector.broadcast %4 : vector<8x1xf32> to vector<8x256xf32>
    %6 = vector.broadcast %cst_2 : f32 to vector<8x256xf32>
    %7 = arith.select %3, %5, %6 : vector<8x256xi1>, vector<8x256xf32>
    %c0_3 = arith.constant 0 : index
    %c0_4 = arith.constant 0 : index
    %8 = vector.load %arg2[%c0_3, %c0_4] : memref<32x72xf32, #tpu.memory_space<vmem>>, vector<32x8xf32>
    %c0_5 = arith.constant 0 : index
    %c0_6 = arith.constant 0 : index
    %9 = vector.load %arg3[%c0_5, %c0_6] : memref<32x8xf32, #tpu.memory_space<vmem>>, vector<32x1xf32>
    %cst_7 = arith.constant dense<0.000000e+00> : vector<32x256xf32>
    %10 = tpu.matmul %8, %0, %cst_7 {dimension_numbers = #tpu.dot_dimension_numbers<[1], [0], [0], [1], [0, 0, 1, 1], [], []>} : vector<32x8xf32>, vector<8x256xf32>, vector<32x256xf32> -> vector<32x256xf32>
    %11 = vector.broadcast %9 : vector<32x1xf32> to vector<32x256xf32>
    %12 = arith.addf %10, %11 : vector<32x256xf32>
    %cst_8 = arith.constant 0.000000e+00 : f32
    %13 = vector.broadcast %cst_8 : f32 to vector<32x256xf32>
    %14 = arith.maximumf %12, %13 : vector<32x256xf32>
    %c0_9 = arith.constant 0 : index
    %c1 = arith.constant 1 : index
    %15 = vector.load %arg3[%c0_9, %c1] : memref<32x8xf32, #tpu.memory_space<vmem>>, vector<32x1xf32>
    %c0_10 = arith.constant 0 : index
    %c2 = arith.constant 2 : index
    %16 = vector.load %arg3[%c0_10, %c2] : memref<32x8xf32, #tpu.memory_space<vmem>>, vector<32x1xf32>
    %cst_11 = arith.constant dense<0.000000e+00> : vector<256xf32>
    %17 = vector.multi_reduction <add>, %14, %cst_11 [0] : vector<32x256xf32> to vector<256xf32>
    %18 = vector.shape_cast %17 : vector<256xf32> to vector<1x256xf32>
    %cst_12 = arith.constant 3.200000e+01 : f32
    %19 = vector.broadcast %cst_12 : f32 to vector<1x256xf32>
    %20 = arith.divf %18, %19 : vector<1x256xf32>
    %21 = vector.broadcast %20 : vector<1x256xf32> to vector<32x256xf32>
    %22 = arith.subf %14, %21 : vector<32x256xf32>
    %23 = arith.mulf %22, %22 : vector<32x256xf32>
    %cst_13 = arith.constant dense<0.000000e+00> : vector<256xf32>
    %24 = vector.multi_reduction <add>, %23, %cst_13 [0] : vector<32x256xf32> to vector<256xf32>
    %25 = vector.shape_cast %24 : vector<256xf32> to vector<1x256xf32>
    %cst_14 = arith.constant 3.200000e+01 : f32
    %26 = vector.broadcast %cst_14 : f32 to vector<1x256xf32>
    %27 = arith.divf %25, %26 : vector<1x256xf32>
    %cst_15 = arith.constant 9.99999974E-6 : f32
    %28 = vector.broadcast %cst_15 : f32 to vector<1x256xf32>
    %29 = arith.addf %27, %28 : vector<1x256xf32>
    %30 = math.rsqrt %29 : vector<1x256xf32>
    %31 = vector.broadcast %30 : vector<1x256xf32> to vector<32x256xf32>
    %32 = arith.mulf %22, %31 : vector<32x256xf32>
    %33 = vector.broadcast %15 : vector<32x1xf32> to vector<32x256xf32>
    %34 = arith.mulf %32, %33 : vector<32x256xf32>
    %35 = vector.broadcast %16 : vector<32x1xf32> to vector<32x256xf32>
    %36 = arith.addf %34, %35 : vector<32x256xf32>
    %c0_16 = arith.constant 0 : index
    %c8 = arith.constant 8 : index
    %37 = vector.load %arg2[%c0_16, %c8] : memref<32x72xf32, #tpu.memory_space<vmem>>, vector<32x32xf32>
    %c0_17 = arith.constant 0 : index
    %c3 = arith.constant 3 : index
    %38 = vector.load %arg3[%c0_17, %c3] : memref<32x8xf32, #tpu.memory_space<vmem>>, vector<32x1xf32>
    %cst_18 = arith.constant dense<0.000000e+00> : vector<32x256xf32>
    %39 = tpu.matmul %37, %36, %cst_18 {dimension_numbers = #tpu.dot_dimension_numbers<[1], [0], [0], [1], [0, 0, 1, 1], [], []>} : vector<32x32xf32>, vector<32x256xf32>, vector<32x256xf32> -> vector<32x256xf32>
    %40 = vector.broadcast %38 : vector<32x1xf32> to vector<32x256xf32>
    %41 = arith.addf %39, %40 : vector<32x256xf32>
    %cst_19 = arith.constant 0.000000e+00 : f32
    %42 = vector.broadcast %cst_19 : f32 to vector<32x256xf32>
    %43 = arith.maximumf %41, %42 : vector<32x256xf32>
    %c0_20 = arith.constant 0 : index
    %c4 = arith.constant 4 : index
    %44 = vector.load %arg3[%c0_20, %c4] : memref<32x8xf32, #tpu.memory_space<vmem>>, vector<32x1xf32>
    %c0_21 = arith.constant 0 : index
    %c5 = arith.constant 5 : index
    %45 = vector.load %arg3[%c0_21, %c5] : memref<32x8xf32, #tpu.memory_space<vmem>>, vector<32x1xf32>
    %cst_22 = arith.constant dense<0.000000e+00> : vector<256xf32>
    %46 = vector.multi_reduction <add>, %43, %cst_22 [0] : vector<32x256xf32> to vector<256xf32>
    %47 = vector.shape_cast %46 : vector<256xf32> to vector<1x256xf32>
    %cst_23 = arith.constant 3.200000e+01 : f32
    %48 = vector.broadcast %cst_23 : f32 to vector<1x256xf32>
    %49 = arith.divf %47, %48 : vector<1x256xf32>
    %50 = vector.broadcast %49 : vector<1x256xf32> to vector<32x256xf32>
    %51 = arith.subf %43, %50 : vector<32x256xf32>
    %52 = arith.mulf %51, %51 : vector<32x256xf32>
    %cst_24 = arith.constant dense<0.000000e+00> : vector<256xf32>
    %53 = vector.multi_reduction <add>, %52, %cst_24 [0] : vector<32x256xf32> to vector<256xf32>
    %54 = vector.shape_cast %53 : vector<256xf32> to vector<1x256xf32>
    %cst_25 = arith.constant 3.200000e+01 : f32
    %55 = vector.broadcast %cst_25 : f32 to vector<1x256xf32>
    %56 = arith.divf %54, %55 : vector<1x256xf32>
    %cst_26 = arith.constant 9.99999974E-6 : f32
    %57 = vector.broadcast %cst_26 : f32 to vector<1x256xf32>
    %58 = arith.addf %56, %57 : vector<1x256xf32>
    %59 = math.rsqrt %58 : vector<1x256xf32>
    %60 = vector.broadcast %59 : vector<1x256xf32> to vector<32x256xf32>
    %61 = arith.mulf %51, %60 : vector<32x256xf32>
    %62 = vector.broadcast %44 : vector<32x1xf32> to vector<32x256xf32>
    %63 = arith.mulf %61, %62 : vector<32x256xf32>
    %64 = vector.broadcast %45 : vector<32x1xf32> to vector<32x256xf32>
    %65 = arith.addf %63, %64 : vector<32x256xf32>
    %c0_27 = arith.constant 0 : index
    %c40 = arith.constant 40 : index
    %66 = vector.load %arg2[%c0_27, %c40] : memref<32x72xf32, #tpu.memory_space<vmem>>, vector<8x32xf32>
    %c0_28 = arith.constant 0 : index
    %c6 = arith.constant 6 : index
    %67 = vector.load %arg3[%c0_28, %c6] : memref<32x8xf32, #tpu.memory_space<vmem>>, vector<8x1xf32>
    %cst_29 = arith.constant dense<0.000000e+00> : vector<8x256xf32>
    %68 = tpu.matmul %66, %65, %cst_29 {dimension_numbers = #tpu.dot_dimension_numbers<[1], [0], [0], [1], [0, 0, 1, 1], [], []>} : vector<8x32xf32>, vector<32x256xf32>, vector<8x256xf32> -> vector<8x256xf32>
    %69 = vector.broadcast %67 : vector<8x1xf32> to vector<8x256xf32>
    %70 = arith.addf %68, %69 : vector<8x256xf32>
    %cst_30 = arith.constant 0.000000e+00 : f32
    %71 = vector.broadcast %cst_30 : f32 to vector<8x256xf32>
    %72 = arith.subf %71, %70 : vector<8x256xf32>
    %73 = math.exp %72 : vector<8x256xf32>
    %cst_31 = arith.constant 1.000000e+00 : f32
    %74 = vector.broadcast %cst_31 : f32 to vector<8x256xf32>
    %75 = arith.addf %74, %73 : vector<8x256xf32>
    %76 = tpu.reciprocal %75 {approx = true} : vector<8x256xf32> -> vector<8x256xf32>
    %77 = arith.addf %76, %7 : vector<8x256xf32>
    %c0_32 = arith.constant 0 : index
    %c0_33 = arith.constant 0 : index
    %78 = vector.load %arg4[%c0_32, %c0_33] : memref<8x256xf32, #tpu.memory_space<vmem>>, vector<8x256xf32>
    tpu.vector_store %arg4[%c0_32, %c0_33], %77 {strides = array<i32>} : memref<8x256xf32, #tpu.memory_space<vmem>>, vector<8x256xf32>,
    return
  }
  func.func @transform_0(%arg0: i32) -> (i32, i32) {
    %c0_i32 = arith.constant 0 : i32
    %c0_i32_0 = arith.constant 0 : i32
    return %c0_i32, %arg0 : i32, i32
  }
  func.func @transform_1(%arg0: i32) -> (i32, i32) {
    %c0_i32 = arith.constant 0 : i32
    %c0_i32_0 = arith.constant 0 : i32
    %c0_i32_1 = arith.constant 0 : i32
    return %c0_i32, %c0_i32_0 : i32, i32
  }
  func.func @transform_2(%arg0: i32) -> (i32, i32) {
    %c0_i32 = arith.constant 0 : i32
    %c0_i32_0 = arith.constant 0 : i32
    %c0_i32_1 = arith.constant 0 : i32
    return %c0_i32, %c0_i32_0 : i32, i32
  }
  func.func @transform_3(%arg0: i32) -> (i32, i32) {
    %c0_i32 = arith.constant 0 : i32
    %c0_i32_0 = arith.constant 0 : i32
    return %c0_i32, %arg0 : i32, i32
  }
}

</mosaic_0001>

<llo_original>
// kernel: step_nlp_forward.1
$region0: #{step_nlp_forward.1}
  #allocation0 [shape = 'u32[]', space=smem, size = 0x4, offset = 0x4, fixed_abs, tag = 'smem constant byte address 0x4 - core index']
  #allocation1 [shape = 'u32[144,128]{1,0:T(1,128)}', space=vmem, size = 0x12000, scoped, tag = 'internal scratch']
  %s0 = inlined_call_operand.hbm [shape: f32[8,300], index: 0, kind: input, shape index: {}]
  %s1 = inlined_call_operand.vmem [shape: f32[32,72], index: 1, kind: input, shape index: {}]
  %s2 = inlined_call_operand.vmem [shape: f32[32,8], index: 2, kind: input, shape index: {}]
  %s3 = inlined_call_operand.hbm [shape: f32[8,300], index: 3, kind: output, shape index: {}]
  %s4 = sld [smem:[#allocation0]]
  $region49: #{step_nlp_forward.1} parent=0
    _
  %s6 = ssub.s32 1, %s4
  %s7 = scalar_select 0, %s6, %s4
  $region1: #{step_nlp_forward.1} parent=0
    #allocation2 [shape = 'u8[16384]{0}', space=vmem, size = 0x4000, scoped, tag = 'input window, operand 0']
    #allocation3 [shape = 's32[2]{0}', space=sflag, size = 0x8, scoped, tag = 'scoped memory for step_nlp_forward.1']
    #allocation4 [shape = 's32[2]{0}', space=sflag, size = 0x8, scoped, tag = 'scoped memory for step_nlp_forward.1']
    #allocation5 [shape = 'u8[16384]{0}', space=vmem, size = 0x4000, scoped, tag = 'output window, operand 0']
    %8 = vsyncpa [#allocation3], 0
    %s9 = scalar_lea.sflag [#allocation3], 1
    %10 = vsyncpa %s9, 0
    %11 = vsyncpa [#allocation4], 0
    %s12 = scalar_lea.sflag [#allocation4], 1
    %13 = vsyncpa %s12, 0
    loop: start=0, step=1, limit=4
    $region2: #{step_nlp_forward.1} parent=1 // loop_pre_header
      _
    $region3: #{step_nlp_forward.1} parent=1 // loop_header
      %s15 = sphi 0, %s19
      %p16 = scmp.ge.s32.totalorder %s15, 4
      %s25 = sphi 0, %s27
      %s28 = sphi 0, %s25
      %s29 = sphi 0, %s28
      %s45 = sphi 0, %s29
      %s49 = sphi 0, %s49
      %s51 = sphi 0, %s49
      %s52 = sphi 0, %s51
      %s66 = sphi 0, %s52
      %s70 = sphi 0, %s70
      %s72 = sphi 0, %s70
      %s73 = sphi 0, %s72
      %s87 = sphi 0, %s73
      %s93 = sphi 0, %s95
      %s96 = sphi 0, %s93
      %s97 = sphi 0, %s96
      %s113 = sphi 0, %s97
    $region4: #{step_nlp_forward.1} parent=1 // loop_header_branch
      %18 = sbr.rel (%p16) target = $region8
    $region5: #{step_nlp_forward.1} parent=1 // loop_body
      %s20 = ssub.s32 %s15, 1
      %s21 = ssub.s32 %s15, 2
      %s22 = sadd.s32 %s15, 1
      %s23 = ssub.s32 %s15, %s22
      %p24 = scmp.eq.s32.totalorder %s23, 0
      %s26 = sadd.s32 %s25, 1
      %s27 = scalar_select %p24, %s25, %s26
      %p30 = pneg %p24
      %p31 = scmp.eq.s32.totalorder %s15, 1
      %p32 = por %p30, %p31
      %p33 = scmp.ne.s32.totalorder %s25, %s28
      %p34 = scmp.eq.s32.totalorder %s15, 0
      %p35 = por %p33, %p34
      %p36 = scmp.ne.s32.totalorder %s25, %s28
      %p37 = scmp.eq.s32.totalorder %s20, 1
      %p38 = por %p36, %p37
      %p39 = scmp.ne.s32.totalorder %s28, %s29
      %p40 = scmp.eq.s32.totalorder %s20, 0
      %p41 = por %p39, %p40
      %p42 = scmp.ne.s32.totalorder %s28, %s29
      %p43 = scmp.eq.s32.totalorder %s21, 1
      %p44 = por %p42, %p43
      %p46 = scmp.ne.s32.totalorder %s29, %s45
      %p47 = scmp.eq.s32.totalorder %s21, 0
      %p48 = por %p46, %p47
      %s50 = sadd.s32 %s49, 1
      %p53 = scmp.eq.s32.totalorder %s15, 1
      %p54 = scmp.ne.s32.totalorder %s49, %s51
      %p55 = scmp.eq.s32.totalorder %s15, 0
      %p56 = por %p54, %p55
      %p57 = scmp.ne.s32.totalorder %s49, %s51
      %p58 = scmp.eq.s32.totalorder %s20, 1
      %p59 = por %p57, %p58
      %p60 = scmp.ne.s32.totalorder %s51, %s52
      %p61 = scmp.eq.s32.totalorder %s20, 0
      %p62 = por %p60, %p61
      %p63 = scmp.ne.s32.totalorder %s51, %s52
      %p64 = scmp.eq.s32.totalorder %s21, 1
      %p65 = por %p63, %p64
      %p67 = scmp.ne.s32.totalorder %s52, %s66
      %p68 = scmp.eq.s32.totalorder %s21, 0
      %p69 = por %p67, %p68
      %s71 = sadd.s32 %s70, 1
      %p74 = scmp.eq.s32.totalorder %s15, 1
      %p75 = scmp.ne.s32.totalorder %s70, %s72
      %p76 = scmp.eq.s32.totalorder %s15, 0
      %p77 = por %p75, %p76
      %p78 = scmp.ne.s32.totalorder %s70, %s72
      %p79 = scmp.eq.s32.totalorder %s20, 1
      %p80 = por %p78, %p79
      %p81 = scmp.ne.s32.totalorder %s72, %s73
      %p82 = scmp.eq.s32.totalorder %s20, 0
      %p83 = por %p81, %p82
      %p84 = scmp.ne.s32.totalorder %s72, %s73
      %p85 = scmp.eq.s32.totalorder %s21, 1
      %p86 = por %p84, %p85
      %p88 = scmp.ne.s32.totalorder %s73, %s87
      %p89 = scmp.eq.s32.totalorder %s21, 0
      %p90 = por %p88, %p89
      %s91 = ssub.s32 %s15, %s22
      %p92 = scmp.eq.s32.totalorder %s91, 0
      %s94 = sadd.s32 %s93, 1
      %s95 = scalar_select %p92, %s93, %s94
      %p98 = pneg %p92
      %p99 = scmp.eq.s32.totalorder %s15, 1
      %p100 = por %p98, %p99
      %p101 = scmp.ne.s32.totalorder %s93, %s96
      %p102 = scmp.eq.s32.totalorder %s15, 0
      %p103 = por %p101, %p102
      %p104 = scmp.ne.s32.totalorder %s93, %s96
      %p105 = scmp.eq.s32.totalorder %s20, 1
      %p106 = por %p104, %p105
      %p107 = scmp.ne.s32.totalorder %s96, %s97
      %p108 = scmp.eq.s32.totalorder %s20, 0
      %p109 = por %p107, %p108
      %p110 = scmp.ne.s32.totalorder %s96, %s97
      %p111 = scmp.eq.s32.totalorder %s21, 1
      %p112 = por %p110, %p111
      %p114 = scmp.ne.s32.totalorder %s97, %s113
      %p115 = scmp.eq.s32.totalorder %s21, 0
      %p116 = por %p114, %p115
      %p117 = scmp.le.s32.totalorder 1, %s15
      %p118 = scmp.lt.s32.totalorder %s15, 3
      %p119 = pnand %p117, %p118
      %p120 = pneg %p119
      // Predicated region
      $region9: #{step_nlp_forward.1} parent=5 // pred_check
        _
      $region10: #{step_nlp_forward.1} parent=5 // pred_check_branch
        %122 = sbr.rel (%p119) target = $region12
      $region11: #{step_nlp_forward.1} parent=5 // pred_region
        %s123 = ssub.s32 %s15, 1
        // Predicated region
        $region13: #{step_nlp_forward.1} parent=11 // pred_check
          %p124 = pneg %p62
        $region14: #{step_nlp_forward.1} parent=11 // pred_check_branch
          %126 = sbr.rel (%p124) target = $region16
        $region15: #{step_nlp_forward.1} parent=11 // pred_region
          _
        $region16: #{step_nlp_forward.1} parent=11 // pred_fallthru
          _
        // Predicated region
        $region17: #{step_nlp_forward.1} parent=11 // pred_check
          %p127 = pneg %p83
        $region18: #{step_nlp_forward.1} parent=11 // pred_check_branch
          %129 = sbr.rel (%p127) target = $region20
        $region19: #{step_nlp_forward.1} parent=11 // pred_region
          _
        $region20: #{step_nlp_forward.1} parent=11 // pred_fallthru
          _
      $region12: #{step_nlp_forward.1} parent=5 // pred_fallthru
        _
      %p130 = scmp.lt.s32.totalorder %s15, 2
      // Predicated region
      $region21: #{step_nlp_forward.1} parent=5 // pred_check
        %p131 = pneg %p130
      $region22: #{step_nlp_forward.1} parent=5 // pred_check_branch
        %133 = sbr.rel (%p131) target = $region24
      $region23: #{step_nlp_forward.1} parent=5 // pred_region
        // Predicated region
        $region25: #{step_nlp_forward.1} parent=23 // pred_check
          %p134 = pneg %p35
        $region26: #{step_nlp_forward.1} parent=23 // pred_check_branch
          %136 = sbr.rel (%p134) target = $region28
        $region27: #{step_nlp_forward.1} parent=23 // pred_region
          %s137 = sand.u32 %s25, 1
          %s138 = scalar_lea.sflag [#allocation3], %s137
          %s139 = sand.u32 %s25, 1
          %s140 = smul.addr %s139, 16
          %s141 = scalar_lea.vmem [#allocation2], %s140
          %s142 = smul.u32 2, %s15
          %s143 = ssub.s32 3, %s142
          %p144 = scmp.lt.s32.totalorder %s143, 2
          %s145 = scalar_select %p144, %s143, 2
          %s146 = smul.u32 128, %s145
          %s148 = ssub.s32 256, %s146
          %149 = vsyncadd %s138, %s148
          %p150 = scmp.ne.s32.totalorder 0, %s146
          %s151 = smul.addr %s142, 128
          %s152 = scalar_lea.hbm %s0, %s151
          %s153 = smul.u32 %s145, 8
          %s154 = sshll.u32 %s153, 4
          %s155 = sshll.u32 %s141, 4
          %s156 = int_to_ptr.vmem [resolvable:$true] %s155
          %158 = dma.hbm_to_vmem [thread:$0]  (%p150), %s152, %s154, %s156, %s138
        $region28: #{step_nlp_forward.1} parent=23 // pred_fallthru
          _
      $region24: #{step_nlp_forward.1} parent=5 // pred_fallthru
        _
      %p159 = scmp.le.s32.totalorder 1, %s15
      %p160 = scmp.lt.s32.totalorder %s15, 3
      %p161 = pnand %p159, %p160
      %p162 = pneg %p161
      // Predicated region
      $region29: #{step_nlp_forward.1} parent=5 // pred_check
        _
      $region30: #{step_nlp_forward.1} parent=5 // pred_check_branch
        %164 = sbr.rel (%p161) target = $region32
      $region31: #{step_nlp_forward.1} parent=5 // pred_region
        %s165 = ssub.s32 %s15, 1
        %s166 = sand.u32 %s28, 1
        %s167 = scalar_lea.sflag [#allocation3], %s166
        %s168 = sand.u32 %s28, 1
        %s169 = smul.addr %s168, 16
        %s170 = scalar_lea.vmem [#allocation2], %s169
        // Predicated region
        $region33: #{step_nlp_forward.1} parent=31 // pred_check
          %p171 = pneg %p41
        $region34: #{step_nlp_forward.1} parent=31 // pred_check_branch
          %173 = sbr.rel (%p171) target = $region36
        $region35: #{step_nlp_forward.1} parent=31 // pred_region
          %174 = dma.done %s167, 256
        $region36: #{step_nlp_forward.1} parent=31 // pred_fallthru
          _
        %s175 = sand.u32 %s28, 1
        %s176 = scalar_lea.sflag [#allocation3], %s175
        %s177 = sand.u32 %s28, 1
        %s178 = smul.addr %s177, 16
        %s179 = scalar_lea.vmem [#allocation2], %s178
        %p180 = pneg %p41
        %p181 = pneg %p38
        %p182 = pneg %p62
        %p183 = pneg %p59
        %p184 = pneg %p83
        %p185 = pneg %p80
        %p186 = pneg %p109
        %p187 = pneg %p106
        %s188 = sand.u32 %s96, 1
        %s189 = scalar_lea.sflag [#allocation4], %s188
        %s190 = sand.u32 %s96, 1
        %s191 = smul.addr %s190, 16
        %s192 = scalar_lea.vmem [#allocation5], %s191
        %s193 = smul.u32 2, %s20
        %s194 = ssub.s32 3, %s193
        %p195 = scmp.lt.s32.totalorder %s194, 2
        %s196 = scalar_select %p195, %s194, 2
        %s197 = smul.u32 128, %s196
        %s198 = smul.u32 2, %s20
        %s199 = ssub.s32 3, %s198
        %p200 = scmp.lt.s32.totalorder %s199, 2
        %s201 = scalar_select %p200, %s199, 2
        %s202 = smul.u32 128, %s201
        %v203 = vld [vmem:[%s170] sm:$0xff]
        %v204 = vld [vmem:[%s170 + $0x8] sm:$0xff]
        %v205 = vld [vmem:[%s2] sm:$0xff]
        %vm206 = vcmp.gt.f32.partialorder %v203, 0.0
        %vm207 = vcmp.gt.f32.partialorder %v204, 0.0
        %209 = vset.pattern.permute.xlu0 7
        %210 = vperm.xlu0 %209, %v205
        %v211 = vpop.permute.xlu0 %210
        %v213 = vsel %vm206, %v211, 0.0
        %v214 = vsel %vm207, %v211, 0.0
        %v215 = vld [vmem:[%s1] sm:$0xff]
        %v216 = vld [vmem:[%s1 + $0x8] sm:$0xff]
        %v217 = vld [vmem:[%s1 + $0x10] sm:$0xff]
        %v218 = vld [vmem:[%s1 + $0x18] sm:$0xff]
        %v219 = vld [vmem:[%s2] sm:$0xff]
        %v220 = vld [vmem:[%s2 + $0x8] sm:$0xff]
        %v221 = vld [vmem:[%s2 + $0x10] sm:$0xff]
        %v222 = vld [vmem:[%s2 + $0x18] sm:$0xff]
        %224 = vset.pattern.permute.xlu0 0
        %225 = vperm.xlu0 %224, %v219
        %v226 = vpop.permute.xlu0 %225
        %229 = vset.pattern.permute.xlu0 0
        %230 = vperm.xlu0 %229, %v220
        %v231 = vpop.permute.xlu0 %230
        %234 = vset.pattern.permute.xlu0 0
        %235 = vperm.xlu0 %234, %v221
        %v236 = vpop.permute.xlu0 %235
        %239 = vset.pattern.permute.xlu0 0
        %240 = vperm.xlu0 %239, %v222
        %v241 = vpop.permute.xlu0 %240
        %vm243 = vcmask 64512
        %v245 = vsel %vm243, %v215, 0
        %v248 = vsel %vm243, %v216, 0
        %v251 = vsel %vm243, %v217, 0
        %v254 = vsel %vm243, %v218, 0
        %256 = vmatprep.subr.mxu0 0.0
        %257 = vmatpush1.msra.mxu0 0.0
        %258 = vmatprep.subr.mxu0 0.0
        %259 = vmatpush1.msra.mxu0 0.0
        %260 = vmatprep.subr.mxu0 0.0
        %261 = vmatpush1.msra.mxu0 0.0
        %262 = vmatprep.subr.mxu0 0.0
        %263 = vmatpush1.msra.mxu0 0.0
        %264 = vmatprep.subr.mxu0 0.0
        %265 = vmatpush1.msra.mxu0 0.0
        %266 = vmatprep.subr.mxu0 0.0
        %267 = vmatpush1.msra.mxu0 0.0
        %268 = vmatprep.subr.mxu0 0.0
        %269 = vmatpush1.msra.mxu0 0.0
        %270 = vmatprep.subr.mxu0 0.0
        %271 = vmatpush1.msra.mxu0 0.0
        %272 = vmatprep.subr.mxu0 0.0
        %273 = vmatpush1.msra.mxu0 0.0
        %274 = vmatprep.subr.mxu0 0.0
        %275 = vmatpush1.msra.mxu0 0.0
        %276 = vmatprep.subr.mxu0 0.0
        %277 = vmatpush1.msra.mxu0 0.0
        %278 = vmatprep.subr.mxu0 0.0
        %279 = vmatpush1.msra.mxu0 0.0
        %280 = vmatprep.subr.mxu0 0.0
        %281 = vmatpush1.msra.mxu0 0.0
        %282 = vmatprep.subr.mxu0 0.0
        %283 = vmatpush1.msra.mxu0 0.0
        %284 = vmatprep.subr.mxu0 0.0
        %285 = vmatpush1.msra.mxu0 0.0
        %286 = vmatprep.subr.mxu0 %v204
        %287 = vmatpush1.msra.mxu0 %v203
        %288 = vmatprep.subr.mxu0 0.0
        %289 = vmatpush2.msra.mxu0 0.0
        %290 = vmatprep.subr.mxu0 0.0
        %291 = vmatpush2.msra.mxu0 0.0
        %292 = vmatprep.subr.mxu0 0.0
        %293 = vmatpush2.msra.mxu0 0.0
        %294 = vmatprep.subr.mxu0 0.0
        %295 = vmatpush2.msra.mxu0 0.0
        %296 = vmatprep.subr.mxu0 0.0
        %297 = vmatpush2.msra.mxu0 0.0
        %298 = vmatprep.subr.mxu0 0.0
        %299 = vmatpush2.msra.mxu0 0.0
        %300 = vmatprep.subr.mxu0 0.0
        %301 = vmatpush2.msra.mxu0 0.0
        %302 = vmatprep.subr.mxu0 0.0
        %303 = vmatpush2.msra.mxu0 0.0
        %304 = vmatprep.subr.mxu0 0.0
        %305 = vmatpush2.msra.mxu0 0.0
        %306 = vmatprep.subr.mxu0 0.0
        %307 = vmatpush2.msra.mxu0 0.0
        %308 = vmatprep.subr.mxu0 0.0
        %309 = vmatpush2.msra.mxu0 0.0
        %310 = vmatprep.subr.mxu0 0.0
        %311 = vmatpush2.msra.mxu0 0.0
        %312 = vmatprep.subr.mxu0 0.0
        %313 = vmatpush2.msra.mxu0 0.0
        %314 = vmatprep.subr.mxu0 0.0
        %315 = vmatpush2.msra.mxu0 0.0
        %316 = vmatprep.subr.mxu0 0.0
        %317 = vmatpush2.msra.mxu0 0.0
        %318 = vmatprep.subr.mxu0 0.0
        %319 = vmatpush2.msra.mxu0 0.0
        %320 = vmatprep.mubr.f32.mxu0 0.0
        %321 = vmatmul.mubr.f32.gmra.mxu0 %v245
        %v322 = vpop.f32.mrf.mxu0
        %v323 = vadd.f32 %v226, %v322
        %v324 = vpop.f32.mrf.mxu0
        %v325 = vadd.f32 %v226, %v324
        %326 = vmatprep.mubr.f32.mxu0 0.0
        %327 = vmatmul.mubr.f32.gmra.mxu0 %v248
        %v328 = vpop.f32.mrf.mxu0
        %v329 = vadd.f32 %v231, %v328
        %v330 = vpop.f32.mrf.mxu0
        %v331 = vadd.f32 %v231, %v330
        %332 = vmatprep.mubr.f32.mxu0 0.0
        %333 = vmatmul.mubr.f32.gmra.mxu0 %v251
        %v334 = vpop.f32.mrf.mxu0
        %v335 = vadd.f32 %v236, %v334
        %v336 = vpop.f32.mrf.mxu0
        %v337 = vadd.f32 %v236, %v336
        %338 = vmatprep.mubr.f32.mxu0 0.0
        %339 = vmatmul.mubr.f32.gmra.mxu0 %v254
        %v340 = vpop.f32.mrf.mxu0
        %v341 = vadd.f32 %v241, %v340
        %v342 = vpop.f32.mrf.mxu0
        %v343 = vadd.f32 %v241, %v342
        %344 = vdwg.mxu0
        %v345 = vmax.f32 %v323, 0.0
        %v346 = vmax.f32 %v325, 0.0
        %v347 = vmax.f32 %v329, 0.0
        %v348 = vmax.f32 %v331, 0.0
        %v349 = vmax.f32 %v335, 0.0
        %v350 = vmax.f32 %v337, 0.0
        %v351 = vmax.f32 %v341, 0.0
        %v352 = vmax.f32 %v343, 0.0
        %v353 = vadd.f32 %v345, %v347
        %v354 = vadd.f32 %v353, %v349
        %v355 = vadd.f32 %v354, %v351
        %v356 = vrot.slane %v355, 4
        %v357 = vadd.f32 %v355, %v356
        %v358 = vrot.slane %v357, 2
        %v359 = vadd.f32 %v357, %v358
        %v360 = vrot.slane %v359, 1
        %v361 = vadd.f32 %v359, %v360
        %v362 = vadd.f32 %v346, %v348
        %v363 = vadd.f32 %v362, %v350
        %v364 = vadd.f32 %v363, %v352
        %v365 = vrot.slane %v364, 4
        %v366 = vadd.f32 %v364, %v365
        %v367 = vrot.slane %v366, 2
        %v368 = vadd.f32 %v366, %v367
        %v369 = vrot.slane %v368, 1
        %v370 = vadd.f32 %v368, %v369
        %v371 = vrcp.pop 32.0
        %v372 = vmul.f32 %v361, %v371
        %v373 = vmul.f32 %v370, %v371
        %v374 = vsub.f32 %v345, %v372
        %v375 = vsub.f32 %v346, %v373
        %v376 = vsub.f32 %v347, %v372
        %v377 = vsub.f32 %v348, %v373
        %v378 = vsub.f32 %v349, %v372
        %v379 = vsub.f32 %v350, %v373
        %v380 = vsub.f32 %v351, %v372
        %v381 = vsub.f32 %v352, %v373
        %v382 = vmul.f32 %v374, %v374
        %v383 = vmul.f32 %v375, %v375
        %v384 = vmul.f32 %v376, %v376
        %v385 = vmul.f32 %v377, %v377
        %v386 = vmul.f32 %v378, %v378
        %v387 = vmul.f32 %v379, %v379
        %v388 = vmul.f32 %v380, %v380
        %v389 = vmul.f32 %v381, %v381
        %v390 = vadd.f32 %v382, %v384
        %v391 = vadd.f32 %v390, %v386
        %v392 = vadd.f32 %v391, %v388
        %v393 = vrot.slane %v392, 4
        %v394 = vadd.f32 %v392, %v393
        %v395 = vrot.slane %v394, 2
        %v396 = vadd.f32 %v394, %v395
        %v397 = vrot.slane %v396, 1
        %v398 = vadd.f32 %v396, %v397
        %v399 = vadd.f32 %v383, %v385
        %v400 = vadd.f32 %v399, %v387
        %v401 = vadd.f32 %v400, %v389
        %v402 = vrot.slane %v401, 4
        %v403 = vadd.f32 %v401, %v402
        %v404 = vrot.slane %v403, 2
        %v405 = vadd.f32 %v403, %v404
        %v406 = vrot.slane %v405, 1
        %v407 = vadd.f32 %v405, %v406
        %v408 = vmul.f32 %v398, %v371
        %v409 = vmul.f32 %v407, %v371
        %v410 = vadd.f32 %v408, 1e-05
        %v411 = vadd.f32 %v409, 1e-05
        %v412 = vrsqrt.pop %v410
        %v413 = vrsqrt.pop %v411
        %v414 = vmul.f32 %v374, %v412
        %v415 = vmul.f32 %v375, %v413
        %v416 = vmul.f32 %v376, %v412
        %v417 = vmul.f32 %v377, %v413
        %v418 = vmul.f32 %v378, %v412
        %v419 = vmul.f32 %v379, %v413
        %v420 = vmul.f32 %v380, %v412
        %v421 = vmul.f32 %v381, %v413
        %422 = vset.pattern.permute.xlu0 1
        %423 = vperm.xlu0 %422, %v219
        %v424 = vpop.permute.xlu0 %423
        %426 = vset.pattern.permute.xlu0 1
        %427 = vperm.xlu0 %426, %v220
        %v428 = vpop.permute.xlu0 %427
        %430 = vset.pattern.permute.xlu0 1
        %431 = vperm.xlu0 %430, %v221
        %v432 = vpop.permute.xlu0 %431
        %434 = vset.pattern.permute.xlu0 1
        %435 = vperm.xlu0 %434, %v222
        %v436 = vpop.permute.xlu0 %435
        %v438 = vmul.f32 %v414, %v424
        %v439 = vmul.f32 %v415, %v424
        %v440 = vmul.f32 %v416, %v428
        %v441 = vmul.f32 %v417, %v428
        %v442 = vmul.f32 %v418, %v432
        %v443 = vmul.f32 %v419, %v432
        %v444 = vmul.f32 %v420, %v436
        %v445 = vmul.f32 %v421, %v436
        %446 = vset.pattern.permute.xlu0 2
        %447 = vperm.xlu0 %446, %v219
        %v448 = vpop.permute.xlu0 %447
        %450 = vset.pattern.permute.xlu0 2
        %451 = vperm.xlu0 %450, %v220
        %v452 = vpop.permute.xlu0 %451
        %454 = vset.pattern.permute.xlu0 2
        %455 = vperm.xlu0 %454, %v221
        %v456 = vpop.permute.xlu0 %455
        %458 = vset.pattern.permute.xlu0 2
        %459 = vperm.xlu0 %458, %v222
        %v460 = vpop.permute.xlu0 %459
        %v462 = vadd.f32 %v438, %v448
        %v463 = vadd.f32 %v439, %v448
        %v464 = vadd.f32 %v440, %v452
        %v465 = vadd.f32 %v441, %v452
        %v466 = vadd.f32 %v442, %v456
        %v467 = vadd.f32 %v443, %v456
        %v468 = vadd.f32 %v444, %v460
        %v469 = vadd.f32 %v445, %v460
        %470 = vset.pattern.permute.xlu0 3
        %471 = vperm.xlu0 %470, %v219
        %v472 = vpop.permute.xlu0 %471
        %474 = vset.pattern.permute.xlu0 3
        %475 = vperm.xlu0 %474, %v220
        %v476 = vpop.permute.xlu0 %475
        %478 = vset.pattern.permute.xlu0 3
        %479 = vperm.xlu0 %478, %v221
        %v480 = vpop.permute.xlu0 %479
        %482 = vset.pattern.permute.xlu0 3
        %483 = vperm.xlu0 %482, %v222
        %v484 = vpop.permute.xlu0 %483
        %486 = vrot.lane.b32.xlu0 %v215, 120
        %v487 = vpop.permute.xlu0 %486
        %488 = vrot.lane.b32.xlu0 %v216, 120
        %v489 = vpop.permute.xlu0 %488
        %490 = vrot.lane.b32.xlu0 %v217, 120
        %v491 = vpop.permute.xlu0 %490
        %492 = vrot.lane.b32.xlu0 %v218, 120
        %v493 = vpop.permute.xlu0 %492
        %vm494 = vcmask 261120
        %v495 = vsel %vm494, %v487, 0
        %v497 = vsel %vm494, %v489, 0
        %v499 = vsel %vm494, %v491, 0
        %v501 = vsel %vm494, %v493, 0
        %503 = vmatprep.subr.mxu0 0.0
        %504 = vmatpush1.msra.mxu0 0.0
        %505 = vmatprep.subr.mxu0 0.0
        %506 = vmatpush1.msra.mxu0 0.0
        %507 = vmatprep.subr.mxu0 0.0
        %508 = vmatpush1.msra.mxu0 0.0
        %509 = vmatprep.subr.mxu0 0.0
        %510 = vmatpush1.msra.mxu0 0.0
        %511 = vmatprep.subr.mxu0 0.0
        %512 = vmatpush1.msra.mxu0 0.0
        %513 = vmatprep.subr.mxu0 0.0
        %514 = vmatpush1.msra.mxu0 0.0
        %515 = vmatprep.subr.mxu0 0.0
        %516 = vmatpush1.msra.mxu0 0.0
        %517 = vmatprep.subr.mxu0 0.0
        %518 = vmatpush1.msra.mxu0 0.0
        %519 = vmatprep.subr.mxu0 0.0
        %520 = vmatpush1.msra.mxu0 0.0
        %521 = vmatprep.subr.mxu0 0.0
        %522 = vmatpush1.msra.mxu0 0.0
        %523 = vmatprep.subr.mxu0 0.0
        %524 = vmatpush1.msra.mxu0 0.0
        %525 = vmatprep.subr.mxu0 0.0
        %526 = vmatpush1.msra.mxu0 0.0
        %527 = vmatprep.subr.mxu0 %v469
        %528 = vmatpush1.msra.mxu0 %v468
        %529 = vmatprep.subr.mxu0 %v467
        %530 = vmatpush1.msra.mxu0 %v466
        %531 = vmatprep.subr.mxu0 %v465
        %532 = vmatpush1.msra.mxu0 %v464
        %533 = vmatprep.subr.mxu0 %v463
        %534 = vmatpush1.msra.mxu0 %v462
        %535 = vmatprep.subr.mxu0 0.0
        %536 = vmatpush2.msra.mxu0 0.0
        %537 = vmatprep.subr.mxu0 0.0
        %538 = vmatpush2.msra.mxu0 0.0
        %539 = vmatprep.subr.mxu0 0.0
        %540 = vmatpush2.msra.mxu0 0.0
        %541 = vmatprep.subr.mxu0 0.0
        %542 = vmatpush2.msra.mxu0 0.0
        %543 = vmatprep.subr.mxu0 0.0
        %544 = vmatpush2.msra.mxu0 0.0
        %545 = vmatprep.subr.mxu0 0.0
        %546 = vmatpush2.msra.mxu0 0.0
        %547 = vmatprep.subr.mxu0 0.0
        %548 = vmatpush2.msra.mxu0 0.0
        %549 = vmatprep.subr.mxu0 0.0
        %550 = vmatpush2.msra.mxu0 0.0
        %551 = vmatprep.subr.mxu0 0.0
        %552 = vmatpush2.msra.mxu0 0.0
        %553 = vmatprep.subr.mxu0 0.0
        %554 = vmatpush2.msra.mxu0 0.0
        %555 = vmatprep.subr.mxu0 0.0
        %556 = vmatpush2.msra.mxu0 0.0
        %557 = vmatprep.subr.mxu0 0.0
        %558 = vmatpush2.msra.mxu0 0.0
        %559 = vmatprep.subr.mxu0 0.0
        %560 = vmatpush2.msra.mxu0 0.0
        %561 = vmatprep.subr.mxu0 0.0
        %562 = vmatpush2.msra.mxu0 0.0
        %563 = vmatprep.subr.mxu0 0.0
        %564 = vmatpush2.msra.mxu0 0.0
        %565 = vmatprep.subr.mxu0 0.0
        %566 = vmatpush2.msra.mxu0 0.0
        %567 = vmatprep.mubr.f32.mxu0 0.0
        %568 = vmatmul.mubr.f32.gmra.mxu0 %v495
        %v569 = vpop.f32.mrf.mxu0
        %v570 = vadd.f32 %v472, %v569
        %v571 = vpop.f32.mrf.mxu0
        %v572 = vadd.f32 %v472, %v571
        %573 = vmatprep.mubr.f32.mxu0 0.0
        %574 = vmatmul.mubr.f32.gmra.mxu0 %v497
        %v575 = vpop.f32.mrf.mxu0
        %v576 = vadd.f32 %v476, %v575
        %v577 = vpop.f32.mrf.mxu0
        %v578 = vadd.f32 %v476, %v577
        %579 = vmatprep.mubr.f32.mxu0 0.0
        %580 = vmatmul.mubr.f32.gmra.mxu0 %v499
        %v581 = vpop.f32.mrf.mxu0
        %v582 = vadd.f32 %v480, %v581
        %v583 = vpop.f32.mrf.mxu0
        %v584 = vadd.f32 %v480, %v583
        %585 = vmatprep.mubr.f32.mxu0 0.0
        %586 = vmatmul.mubr.f32.gmra.mxu0 %v501
        %v587 = vpop.f32.mrf.mxu0
        %v588 = vadd.f32 %v484, %v587
        %v589 = vpop.f32.mrf.mxu0
        %v590 = vadd.f32 %v484, %v589
        %591 = vdwg.mxu0
        %v592 = vmax.f32 %v570, 0.0
        %v593 = vmax.f32 %v572, 0.0
        %v594 = vmax.f32 %v576, 0.0
        %v595 = vmax.f32 %v578, 0.0
        %v596 = vmax.f32 %v582, 0.0
        %v597 = vmax.f32 %v584, 0.0
        %v598 = vmax.f32 %v588, 0.0
        %v599 = vmax.f32 %v590, 0.0
        %v600 = vadd.f32 %v592, %v594
        %v601 = vadd.f32 %v600, %v596
        %v602 = vadd.f32 %v601, %v598
        %v603 = vrot.slane %v602, 4
        %v604 = vadd.f32 %v602, %v603
        %v605 = vrot.slane %v604, 2
        %v606 = vadd.f32 %v604, %v605
        %v607 = vrot.slane %v606, 1
        %v608 = vadd.f32 %v606, %v607
        %v609 = vadd.f32 %v593, %v595
        %v610 = vadd.f32 %v609, %v597
        %v611 = vadd.f32 %v610, %v599
        %v612 = vrot.slane %v611, 4
        %v613 = vadd.f32 %v611, %v612
        %v614 = vrot.slane %v613, 2
        %v615 = vadd.f32 %v613, %v614
        %v616 = vrot.slane %v615, 1
        %v617 = vadd.f32 %v615, %v616
        %v618 = vmul.f32 %v608, %v371
        %v619 = vmul.f32 %v617, %v371
        %v620 = vsub.f32 %v592, %v618
        %v621 = vsub.f32 %v593, %v619
        %v622 = vsub.f32 %v594, %v618
        %v623 = vsub.f32 %v595, %v619
        %v624 = vsub.f32 %v596, %v618
        %v625 = vsub.f32 %v597, %v619
        %v626 = vsub.f32 %v598, %v618
        %v627 = vsub.f32 %v599, %v619
        %v628 = vmul.f32 %v620, %v620
        %v629 = vmul.f32 %v621, %v621
        %v630 = vmul.f32 %v622, %v622
        %v631 = vmul.f32 %v623, %v623
        %v632 = vmul.f32 %v624, %v624
        %v633 = vmul.f32 %v625, %v625
        %v634 = vmul.f32 %v626, %v626
        %v635 = vmul.f32 %v627, %v627
        %v636 = vadd.f32 %v628, %v630
        %v637 = vadd.f32 %v636, %v632
        %v638 = vadd.f32 %v637, %v634
        %v639 = vrot.slane %v638, 4
        %v640 = vadd.f32 %v638, %v639
        %v641 = vrot.slane %v640, 2
        %v642 = vadd.f32 %v640, %v641
        %v643 = vrot.slane %v642, 1
        %v644 = vadd.f32 %v642, %v643
        %v645 = vadd.f32 %v629, %v631
        %v646 = vadd.f32 %v645, %v633
        %v647 = vadd.f32 %v646, %v635
        %v648 = vrot.slane %v647, 4
        %v649 = vadd.f32 %v647, %v648
        %v650 = vrot.slane %v649, 2
        %v651 = vadd.f32 %v649, %v650
        %v652 = vrot.slane %v651, 1
        %v653 = vadd.f32 %v651, %v652
        %v654 = vmul.f32 %v644, %v371
        %v655 = vmul.f32 %v653, %v371
        %v656 = vadd.f32 %v654, 1e-05
        %v657 = vadd.f32 %v655, 1e-05
        %v658 = vrsqrt.pop %v656
        %v659 = vrsqrt.pop %v657
        %v660 = vmul.f32 %v620, %v658
        %v661 = vmul.f32 %v621, %v659
        %v662 = vmul.f32 %v622, %v658
        %v663 = vmul.f32 %v623, %v659
        %v664 = vmul.f32 %v624, %v658
        %v665 = vmul.f32 %v625, %v659
        %v666 = vmul.f32 %v626, %v658
        %v667 = vmul.f32 %v627, %v659
        %668 = vset.pattern.permute.xlu0 4
        %669 = vperm.xlu0 %668, %v219
        %v670 = vpop.permute.xlu0 %669
        %672 = vset.pattern.permute.xlu0 4
        %673 = vperm.xlu0 %672, %v220
        %v674 = vpop.permute.xlu0 %673
        %676 = vset.pattern.permute.xlu0 4
        %677 = vperm.xlu0 %676, %v221
        %v678 = vpop.permute.xlu0 %677
        %680 = vset.pattern.permute.xlu0 4
        %681 = vperm.xlu0 %680, %v222
        %v682 = vpop.permute.xlu0 %681
        %v684 = vmul.f32 %v660, %v670
        %v685 = vmul.f32 %v661, %v670
        %v686 = vmul.f32 %v662, %v674
        %v687 = vmul.f32 %v663, %v674
        %v688 = vmul.f32 %v664, %v678
        %v689 = vmul.f32 %v665, %v678
        %v690 = vmul.f32 %v666, %v682
        %v691 = vmul.f32 %v667, %v682
        %692 = vset.pattern.permute.xlu0 5
        %693 = vperm.xlu0 %692, %v219
        %v694 = vpop.permute.xlu0 %693
        %696 = vset.pattern.permute.xlu0 5
        %697 = vperm.xlu0 %696, %v220
        %v698 = vpop.permute.xlu0 %697
        %700 = vset.pattern.permute.xlu0 5
        %701 = vperm.xlu0 %700, %v221
        %v702 = vpop.permute.xlu0 %701
        %704 = vset.pattern.permute.xlu0 5
        %705 = vperm.xlu0 %704, %v222
        %v706 = vpop.permute.xlu0 %705
        %v708 = vadd.f32 %v684, %v694
        %v709 = vadd.f32 %v685, %v694
        %v710 = vadd.f32 %v686, %v698
        %v711 = vadd.f32 %v687, %v698
        %v712 = vadd.f32 %v688, %v702
        %v713 = vadd.f32 %v689, %v702
        %v714 = vadd.f32 %v690, %v706
        %v715 = vadd.f32 %v691, %v706
        %v716 = vld [vmem:[%s1] sm:$0xff]
        %717 = vset.pattern.permute.xlu0 6
        %718 = vperm.xlu0 %717, %v205
        %v719 = vpop.permute.xlu0 %718
        %722 = vrot.lane.b32.xlu0 %v716, 88
        %v723 = vpop.permute.xlu0 %722
        %v724 = vsel %vm494, %v723, 0
        %726 = vmatprep.subr.mxu0 0.0
        %727 = vmatpush1.msra.mxu0 0.0
        %728 = vmatprep.subr.mxu0 0.0
        %729 = vmatpush1.msra.mxu0 0.0
        %730 = vmatprep.subr.mxu0 0.0
        %731 = vmatpush1.msra.mxu0 0.0
        %732 = vmatprep.subr.mxu0 0.0
        %733 = vmatpush1.msra.mxu0 0.0
        %734 = vmatprep.subr.mxu0 0.0
        %735 = vmatpush1.msra.mxu0 0.0
        %736 = vmatprep.subr.mxu0 0.0
        %737 = vmatpush1.msra.mxu0 0.0
        %738 = vmatprep.subr.mxu0 0.0
        %739 = vmatpush1.msra.mxu0 0.0
        %740 = vmatprep.subr.mxu0 0.0
        %741 = vmatpush1.msra.mxu0 0.0
        %742 = vmatprep.subr.mxu0 0.0
        %743 = vmatpush1.msra.mxu0 0.0
        %744 = vmatprep.subr.mxu0 0.0
        %745 = vmatpush1.msra.mxu0 0.0
        %746 = vmatprep.subr.mxu0 0.0
        %747 = vmatpush1.msra.mxu0 0.0
        %748 = vmatprep.subr.mxu0 0.0
        %749 = vmatpush1.msra.mxu0 0.0
        %750 = vmatprep.subr.mxu0 %v715
        %751 = vmatpush1.msra.mxu0 %v714
        %752 = vmatprep.subr.mxu0 %v713
        %753 = vmatpush1.msra.mxu0 %v712
        %754 = vmatprep.subr.mxu0 %v711
        %755 = vmatpush1.msra.mxu0 %v710
        %756 = vmatprep.subr.mxu0 %v709
        %757 = vmatpush1.msra.mxu0 %v708
        %758 = vmatprep.subr.mxu0 0.0
        %759 = vmatpush2.msra.mxu0 0.0
        %760 = vmatprep.subr.mxu0 0.0
        %761 = vmatpush2.msra.mxu0 0.0
        %762 = vmatprep.subr.mxu0 0.0
        %763 = vmatpush2.msra.mxu0 0.0
        %764 = vmatprep.subr.mxu0 0.0
        %765 = vmatpush2.msra.mxu0 0.0
        %766 = vmatprep.subr.mxu0 0.0
        %767 = vmatpush2.msra.mxu0 0.0
        %768 = vmatprep.subr.mxu0 0.0
        %769 = vmatpush2.msra.mxu0 0.0
        %770 = vmatprep.subr.mxu0 0.0
        %771 = vmatpush2.msra.mxu0 0.0
        %772 = vmatprep.subr.mxu0 0.0
        %773 = vmatpush2.msra.mxu0 0.0
        %774 = vmatprep.subr.mxu0 0.0
        %775 = vmatpush2.msra.mxu0 0.0
        %776 = vmatprep.subr.mxu0 0.0
        %777 = vmatpush2.msra.mxu0 0.0
        %778 = vmatprep.subr.mxu0 0.0
        %779 = vmatpush2.msra.mxu0 0.0
        %780 = vmatprep.subr.mxu0 0.0
        %781 = vmatpush2.msra.mxu0 0.0
        %782 = vmatprep.subr.mxu0 0.0
        %783 = vmatpush2.msra.mxu0 0.0
        %784 = vmatprep.subr.mxu0 0.0
        %785 = vmatpush2.msra.mxu0 0.0
        %786 = vmatprep.subr.mxu0 0.0
        %787 = vmatpush2.msra.mxu0 0.0
        %788 = vmatprep.subr.mxu0 0.0
        %789 = vmatpush2.msra.mxu0 0.0
        %790 = vmatprep.mubr.f32.mxu0 0.0
        %791 = vmatmul.mubr.f32.gmra.mxu0 %v724
        %v792 = vpop.f32.mrf.mxu0
        %v793 = vadd.f32 %v719, %v792
        %v794 = vpop.f32.mrf.mxu0
        %v795 = vadd.f32 %v719, %v794
        %796 = vdwg.mxu0
        %v797 = vsub.f32 0.0, %v793
        %v798 = vsub.f32 0.0, %v795
        %v799 = vmul.f32 %v797, 1.442695
        %v800 = vpow.pop %v799
        %v801 = vmul.f32 %v798, 1.442695
        %v802 = vpow.pop %v801
        %v803 = vadd.f32 %v800, 1.0
        %v804 = vadd.f32 %v802, 1.0
        %v805 = vrcp.pop %v803
        %v806 = vrcp.pop %v804
        %v807 = vadd.f32 %v805, %v213
        %v808 = vadd.f32 %v806, %v214
        %809 = vst [vmem:[%s192] sm:$0xff] %v807
        %810 = vst [vmem:[%s192 + $0x8] sm:$0xff] %v808
        %s811 = sand.u32 %s96, 1
        %s812 = scalar_lea.sflag [#allocation4], %s811
        %s813 = sand.u32 %s96, 1
        %s814 = smul.addr %s813, 16
        %s815 = scalar_lea.vmem [#allocation5], %s814
        // Predicated region
        $region37: #{step_nlp_forward.1} parent=31 // pred_check
          %p816 = pneg %p106
        $region38: #{step_nlp_forward.1} parent=31 // pred_check_branch
          %818 = sbr.rel (%p816) target = $region40
        $region39: #{step_nlp_forward.1} parent=31 // pred_region
          %s819 = smul.u32 2, %s20
          %s820 = ssub.s32 3, %s819
          %p821 = scmp.lt.s32.totalorder %s820, 2
          %s822 = scalar_select %p821, %s820, 2
          %s823 = smul.u32 128, %s822
          %s825 = ssub.s32 256, %s823
          %826 = vsyncadd %s812, %s825
          %p827 = scmp.ne.s32.totalorder 0, %s823
          %s828 = smul.addr %s819, 128
          %s829 = scalar_lea.hbm %s3, %s828
          %s830 = smul.u32 %s822, 8
          %s831 = sshll.u32 %s830, 4
          %s832 = sshll.u32 %s815, 4
          %s833 = int_to_ptr.vmem [resolvable:$true] %s832
          %835 = dma.vmem_to_hbm [thread:$0]  (%p827), %s833, %s831, %s829, %s812
        $region40: #{step_nlp_forward.1} parent=31 // pred_fallthru
          _
      $region32: #{step_nlp_forward.1} parent=5 // pred_fallthru
        _
      %p836 = scmp.le.s32.totalorder 2, %s15
      // Predicated region
      $region41: #{step_nlp_forward.1} parent=5 // pred_check
        %p837 = pneg %p836
      $region42: #{step_nlp_forward.1} parent=5 // pred_check_branch
        %839 = sbr.rel (%p837) target = $region44
      $region43: #{step_nlp_forward.1} parent=5 // pred_region
        %s840 = ssub.s32 %s15, 2
        // Predicated region
        $region45: #{step_nlp_forward.1} parent=43 // pred_check
          %p841 = pneg %p112
        $region46: #{step_nlp_forward.1} parent=43 // pred_check_branch
          %843 = sbr.rel (%p841) target = $region48
        $region47: #{step_nlp_forward.1} parent=43 // pred_region
          %s844 = sand.u32 %s97, 1
          %s845 = scalar_lea.sflag [#allocation4], %s844
          %s846 = sand.u32 %s97, 1
          %s847 = smul.addr %s846, 16
          %s848 = scalar_lea.vmem [#allocation5], %s847
          %849 = dma.done %s845, 256
        $region48: #{step_nlp_forward.1} parent=43 // pred_fallthru
          _
      $region44: #{step_nlp_forward.1} parent=5 // pred_fallthru
        _
    $region6: #{step_nlp_forward.1} parent=1 // loop_footer
      %s19 = sadd.s32 1, %s15
    $region7: #{step_nlp_forward.1} parent=1 // loop_footer_branch
      %14 = sbr.rel target = $region3
    $region8: #{step_nlp_forward.1} parent=1 // loop_exit
      _
    %850 = vsyncpa [#allocation3], 1
    %s851 = scalar_lea.sflag [#allocation3], 1
    %852 = vsyncpa %s851, 1
    %853 = vsyncpa [#allocation4], 1
    %s854 = scalar_lea.sflag [#allocation4], 1
    %855 = vsyncpa %s854, 1

</llo_original>
